<compile_context>
chip_gen: v5e
topology: v5e:2x2
jax: 0.10.0
libtpu: 0.0.40
codegen_flags: <defaults>
</compile_context>

<pallas_src>
import math
import jax
import jax.numpy as jnp
from jax.experimental import pallas as pl
from jax.experimental.pallas import tpu as pltpu

_HIDDEN = 256


def _round_up(n, m):
    return ((n + m - 1) // m) * m


def _critic_kernel(xu_ref, w1_ref, b1_ref,
                   w2a_ref, b2a_ref, w2b_ref, b2b_ref,
                   w3_ref, b3_ref,
                   q_ref):
    hidden = w2a_ref.shape[0]

    # Layer 1: single fused bf16 MXU pass for both heads -> (tile_b, 2*hidden).
    h1 = jnp.dot(xu_ref[...], w1_ref[...], preferred_element_type=jnp.float32)
    h1 = jnp.maximum(h1 + b1_ref[...], 0.0).astype(jnp.bfloat16)

    # Layer 2: per head (block-diagonal fusion here would 4x the FLOPs).
    h2a = jnp.maximum(
        jnp.dot(h1[:, :hidden], w2a_ref[...],
                preferred_element_type=jnp.float32) + b2a_ref[...], 0.0)
    h2b = jnp.maximum(
        jnp.dot(h1[:, hidden:], w2b_ref[...],
                preferred_element_type=jnp.float32) + b2b_ref[...], 0.0)

    # Layer 3: one block-diagonal MXU dot for both heads (keeps the critical
    # path on the MXU instead of XLU lane reductions).  w3_ref is (2*hidden,
    # 128) with column 0 = q1 weights, column 1 = q2 weights, rest zero.
    h2 = jnp.concatenate([h2a, h2b], axis=-1).astype(jnp.bfloat16)
    q = jnp.dot(h2, w3_ref[...], preferred_element_type=jnp.float32)
    q_ref[...] = q[:, :2] + b3_ref[...]


def critic_forward(x, a, params, *, max_tile_b=2048):
    """x: (B, obs_dim), a: (B, act_dim) -> (q1, q2) each (B, 1) float32."""
    x = x.astype(jnp.float32)
    a = a.astype(jnp.float32)
    B, obs_dim = x.shape
    _, act_dim = a.shape
    in_dim = obs_dim + act_dim
    H = _HIDDEN

    # ---- Pack params (bf16 matmul operands, f32 biases) -------------------
    w1 = jnp.concatenate([params["w1a"], params["w1b"]],
                         axis=1).astype(jnp.bfloat16)                 # (in, 2H)
    b1 = jnp.concatenate([params["b1a"], params["b1b"]], axis=1)      # (1, 2H)
    w2a = params["w2a"].astype(jnp.bfloat16)                          # (H, H)
    w2b = params["w2b"].astype(jnp.bfloat16)                          # (H, H)
    b2a = params["b2a"]                                               # (1, H)
    b2b = params["b2b"]                                               # (1, H)
    # Block-diagonal, lane-padded layer-3 weight: (2H, 128).
    w3 = jnp.zeros((2 * H, 128), jnp.float32)
    w3 = w3.at[:H, 0].set(params["w3a"][:, 0])
    w3 = w3.at[H:, 1].set(params["w3b"][:, 0]).astype(jnp.bfloat16)
    b3 = jnp.concatenate([params["b3a"], params["b3b"]], axis=1)      # (1, 2)

    # ---- Input: fused xu = concat(x, a), bf16, batch-padded ----------------
    xu = jnp.concatenate([x, a], axis=-1).astype(jnp.bfloat16)        # (B, in)

    # Batch tiling: >= 2 grid steps for B > 256 (v7x dual TensorCore),
    # 256-multiple rows (full MXU row tiles on v6e/v7x), minimal padding.
    if B <= 256:
        tile_b = _round_up(B, 8)
    else:
        tile_b = min(max_tile_b, _round_up(pl.cdiv(B, 2), 256))
    b_pad = _round_up(B, tile_b)
    if b_pad != B:
        xu = jnp.pad(xu, ((0, b_pad - B), (0, 0)))
    grid = (b_pad // tile_b,)

    def batch_spec(cols):
        return pl.BlockSpec((tile_b, cols), lambda i: (i, 0))

    def resident_spec(arr):
        # Full-array block, constant index_map -> stays VMEM-resident.
        return pl.BlockSpec(arr.shape, lambda i: (0, 0))

    weights = (w1, b1, w2a, b2a, w2b, b2b, w3, b3)

    flops = 2 * b_pad * (in_dim * 2 * H + 2 * H * H + 2 * H * 2)
    bytes_accessed = (xu.size * xu.dtype.itemsize
                      + b_pad * 2 * 4
                      + sum(w.size * w.dtype.itemsize for w in weights))

    q = pl.pallas_call(
        _critic_kernel,
        out_shape=jax.ShapeDtypeStruct((b_pad, 2), jnp.float32),
        grid=grid,
        in_specs=[batch_spec(in_dim)] + [resident_spec(w) for w in weights],
        out_specs=batch_spec(2),
        compiler_params=pltpu.CompilerParams(
            dimension_semantics=("parallel",),
            vmem_limit_bytes=32 * 1024 * 1024),
        cost_estimate=pl.CostEstimate(
            flops=flops, transcendentals=0, bytes_accessed=bytes_accessed),
    )(xu, *weights)

    q = q[:B]
    return q[:, 0:1], q[:, 1:2]


def init_critic_params(key, obs_dim, act_dim, hidden=_HIDDEN):
    """Deterministic PyTorch-style (uniform +/- 1/sqrt(fan_in)) init; weights
    stored as [in, out] so the kernel computes x @ W + b."""
    in_dim = obs_dim + act_dim

    def linear(key, fan_in, fan_out):
        kw, kb = jax.random.split(key)
        bound = 1.0 / math.sqrt(fan_in)
        w = jax.random.uniform(kw, (fan_in, fan_out), jnp.float32, -bound, bound)
        b = jax.random.uniform(kb, (1, fan_out), jnp.float32, -bound, bound)
        return w, b

    keys = jax.random.split(key, 6)
    w1a, b1a = linear(keys[0], in_dim, hidden)
    w2a, b2a = linear(keys[1], hidden, hidden)
    w3a, b3a = linear(keys[2], hidden, 1)
    w1b, b1b = linear(keys[3], in_dim, hidden)
    w2b, b2b = linear(keys[4], hidden, hidden)
    w3b, b3b = linear(keys[5], hidden, 1)
    return dict(w1a=w1a, b1a=b1a, w2a=w2a, b2a=b2a, w3a=w3a, b3a=b3a,
                w1b=w1b, b1b=b1b, w2b=w2b, b2b=b2b, w3b=w3b, b3b=b3b)


def critic_forward_ref(x, a, params):
    """Pure-JAX f32 reference for correctness checking."""
    xu = jnp.concatenate([x, a], axis=-1)

    def mlp(w1, b1, w2, b2, w3, b3):
        h = jnp.maximum(xu @ w1 + b1, 0.0)
        h = jnp.maximum(h @ w2 + b2, 0.0)
        return h @ w3 + b3

    q1 = mlp(params["w1a"], params["b1a"], params["w2a"], params["b2a"],
             params["w3a"], params["b3a"])
    q2 = mlp(params["w1b"], params["b1b"], params["w2b"], params["b2b"],
             params["w3b"], params["b3b"])
    return q1, q2


if __name__ == "__main__":
    obs_dim, act_dim, batch = 16, 8, 8

    key = jax.random.PRNGKey(0)
    k_params, k_x, k_a = jax.random.split(key, 3)

    params = init_critic_params(k_params, obs_dim, act_dim)
    x = jax.random.normal(k_x, (batch, obs_dim), jnp.float32)
    a = jax.random.normal(k_a, (batch, act_dim), jnp.float32)

    q1, q2 = critic_forward(x, a, params)
    jax.block_until_ready((q1, q2))

    # bf16-on-MXU tolerance vs. the f32 reference.
    q1_ref, q2_ref = critic_forward_ref(x, a, params)
    assert q1.shape == (batch, 1) and q2.shape == (batch, 1)
    assert jnp.allclose(q1, q1_ref, atol=5e-2, rtol=5e-2)
    assert jnp.allclose(q2, q2_ref, atol=5e-2, rtol=5e-2)

    # Exercise the multi-tile / padded path (B not a multiple of the tile).
    bigB = 2500
    kx2, ka2 = jax.random.split(jax.random.PRNGKey(1))
    x2 = jax.random.normal(kx2, (bigB, obs_dim), jnp.float32)
    a2 = jax.random.normal(ka2, (bigB, act_dim), jnp.float32)
    q1b, q2b = critic_forward(x2, a2, params)
    jax.block_until_ready((q1b, q2b))
    q1b_ref, q2b_ref = critic_forward_ref(x2, a2, params)
    assert q1b.shape == (bigB, 1) and q2b.shape == (bigB, 1)
    assert jnp.allclose(q1b, q1b_ref, atol=5e-2, rtol=5e-2)
    assert jnp.allclose(q2b, q2b_ref, atol=5e-2, rtol=5e-2)

    print("KERNEL_OK")
</pallas_src>

<mosaic_0001>
module attributes {stable_mosaic.version = 11 : i64} {
  func.func @_critic_kernel(%arg0: i32, %arg1: memref<8x24xbf16, #tpu.memory_space<vmem>>, %arg2: memref<24x512xbf16, #tpu.memory_space<vmem>>, %arg3: memref<1x512xf32, #tpu.memory_space<vmem>>, %arg4: memref<256x256xbf16, #tpu.memory_space<vmem>>, %arg5: memref<1x256xf32, #tpu.memory_space<vmem>>, %arg6: memref<256x256xbf16, #tpu.memory_space<vmem>>, %arg7: memref<1x256xf32, #tpu.memory_space<vmem>>, %arg8: memref<512x128xbf16, #tpu.memory_space<vmem>>, %arg9: memref<1x2xf32, #tpu.memory_space<vmem>>, %arg10: memref<8x2xf32, #tpu.memory_space<vmem>>) attributes {dimension_semantics = [#tpu.dimension_semantics<parallel>], iteration_bounds = array<i64: 1>, scalar_prefetch = 0 : i64, scratch_operands = 0 : i64, tpu.core_type = #tpu.core_type<tc>, window_params = [{transform_indices = @transform_0, window_bounds = array<i64: 8, 24>}, {pipeline_mode = #tpu.pipeline_mode<synchronous>, transform_indices = @transform_1, window_bounds = array<i64: 24, 512>}, {pipeline_mode = #tpu.pipeline_mode<synchronous>, transform_indices = @transform_2, window_bounds = array<i64: 1, 512>}, {pipeline_mode = #tpu.pipeline_mode<synchronous>, transform_indices = @transform_3, window_bounds = array<i64: 256, 256>}, {pipeline_mode = #tpu.pipeline_mode<synchronous>, transform_indices = @transform_4, window_bounds = array<i64: 1, 256>}, {pipeline_mode = #tpu.pipeline_mode<synchronous>, transform_indices = @transform_5, window_bounds = array<i64: 256, 256>}, {pipeline_mode = #tpu.pipeline_mode<synchronous>, transform_indices = @transform_6, window_bounds = array<i64: 1, 256>}, {pipeline_mode = #tpu.pipeline_mode<synchronous>, transform_indices = @transform_7, window_bounds = array<i64: 512, 128>}, {pipeline_mode = #tpu.pipeline_mode<synchronous>, transform_indices = @transform_8, window_bounds = array<i64: 1, 2>}, {transform_indices = @transform_9, window_bounds = array<i64: 8, 2>}]} {
    %c0 = arith.constant 0 : index
    %c0_0 = arith.constant 0 : index
    %0 = vector.load %arg1[%c0, %c0_0] : memref<8x24xbf16, #tpu.memory_space<vmem>>, vector<8x24xbf16>
    %c0_1 = arith.constant 0 : index
    %c0_2 = arith.constant 0 : index
    %1 = vector.load %arg2[%c0_1, %c0_2] : memref<24x512xbf16, #tpu.memory_space<vmem>>, vector<24x512xbf16>
    %cst = arith.constant dense<0.000000e+00> : vector<8x512xf32>
    %2 = tpu.matmul %0, %1, %cst {dimension_numbers = #tpu.dot_dimension_numbers<[1], [0], [0], [1], [0, 0, 1, 1], [], []>} : vector<8x24xbf16>, vector<24x512xbf16>, vector<8x512xf32> -> vector<8x512xf32>
    %c0_3 = arith.constant 0 : index
    %c0_4 = arith.constant 0 : index
    %3 = vector.load %arg3[%c0_3, %c0_4] : memref<1x512xf32, #tpu.memory_space<vmem>>, vector<1x512xf32>
    %4 = vector.broadcast %3 : vector<1x512xf32> to vector<8x512xf32>
    %5 = arith.addf %2, %4 : vector<8x512xf32>
    %cst_5 = arith.constant 0.000000e+00 : f32
    %6 = vector.broadcast %cst_5 : f32 to vector<8x512xf32>
    %7 = arith.maximumf %5, %6 : vector<8x512xf32>
    %8 = arith.truncf %7 : vector<8x512xf32> to vector<8x512xbf16>
    %9 = vector.extract_strided_slice %8 {offsets = [0, 0], sizes = [8, 256], strides = [1, 1]} : vector<8x512xbf16> to vector<8x256xbf16>
    %c0_6 = arith.constant 0 : index
    %c0_7 = arith.constant 0 : index
    %10 = vector.load %arg4[%c0_6, %c0_7] : memref<256x256xbf16, #tpu.memory_space<vmem>>, vector<256x256xbf16>
    %cst_8 = arith.constant dense<0.000000e+00> : vector<8x256xf32>
    %11 = tpu.matmul %9, %10, %cst_8 {dimension_numbers = #tpu.dot_dimension_numbers<[1], [0], [0], [1], [0, 0, 1, 1], [], []>} : vector<8x256xbf16>, vector<256x256xbf16>, vector<8x256xf32> -> vector<8x256xf32>
    %c0_9 = arith.constant 0 : index
    %c0_10 = arith.constant 0 : index
    %12 = vector.load %arg5[%c0_9, %c0_10] : memref<1x256xf32, #tpu.memory_space<vmem>>, vector<1x256xf32>
    %13 = vector.broadcast %12 : vector<1x256xf32> to vector<8x256xf32>
    %14 = arith.addf %11, %13 : vector<8x256xf32>
    %cst_11 = arith.constant 0.000000e+00 : f32
    %15 = vector.broadcast %cst_11 : f32 to vector<8x256xf32>
    %16 = arith.maximumf %14, %15 : vector<8x256xf32>
    %17 = vector.extract_strided_slice %8 {offsets = [0, 256], sizes = [8, 256], strides = [1, 1]} : vector<8x512xbf16> to vector<8x256xbf16>
    %c0_12 = arith.constant 0 : index
    %c0_13 = arith.constant 0 : index
    %18 = vector.load %arg6[%c0_12, %c0_13] : memref<256x256xbf16, #tpu.memory_space<vmem>>, vector<256x256xbf16>
    %cst_14 = arith.constant dense<0.000000e+00> : vector<8x256xf32>
    %19 = tpu.matmul %17, %18, %cst_14 {dimension_numbers = #tpu.dot_dimension_numbers<[1], [0], [0], [1], [0, 0, 1, 1], [], []>} : vector<8x256xbf16>, vector<256x256xbf16>, vector<8x256xf32> -> vector<8x256xf32>
    %c0_15 = arith.constant 0 : index
    %c0_16 = arith.constant 0 : index
    %20 = vector.load %arg7[%c0_15, %c0_16] : memref<1x256xf32, #tpu.memory_space<vmem>>, vector<1x256xf32>
    %21 = vector.broadcast %20 : vector<1x256xf32> to vector<8x256xf32>
    %22 = arith.addf %19, %21 : vector<8x256xf32>
    %cst_17 = arith.constant 0.000000e+00 : f32
    %23 = vector.broadcast %cst_17 : f32 to vector<8x256xf32>
    %24 = arith.maximumf %22, %23 : vector<8x256xf32>
    %25 = tpu.concatenate %16, %24 in 1 : vector<8x256xf32>, vector<8x256xf32> -> vector<8x512xf32>
    %26 = arith.truncf %25 : vector<8x512xf32> to vector<8x512xbf16>
    %c0_18 = arith.constant 0 : index
    %c0_19 = arith.constant 0 : index
    %27 = vector.load %arg8[%c0_18, %c0_19] : memref<512x128xbf16, #tpu.memory_space<vmem>>, vector<512x128xbf16>
    %cst_20 = arith.constant dense<0.000000e+00> : vector<8x128xf32>
    %28 = tpu.matmul %26, %27, %cst_20 {dimension_numbers = #tpu.dot_dimension_numbers<[1], [0], [0], [1], [0, 0, 1, 1], [], []>} : vector<8x512xbf16>, vector<512x128xbf16>, vector<8x128xf32> -> vector<8x128xf32>
    %29 = vector.extract_strided_slice %28 {offsets = [0, 0], sizes = [8, 2], strides = [1, 1]} : vector<8x128xf32> to vector<8x2xf32>
    %c0_21 = arith.constant 0 : index
    %c0_22 = arith.constant 0 : index
    %30 = vector.load %arg9[%c0_21, %c0_22] : memref<1x2xf32, #tpu.memory_space<vmem>>, vector<1x2xf32>
    %31 = vector.broadcast %30 : vector<1x2xf32> to vector<8x2xf32>
    %32 = arith.addf %29, %31 : vector<8x2xf32>
    %c0_23 = arith.constant 0 : index
    %c0_24 = arith.constant 0 : index
    %33 = vector.load %arg10[%c0_23, %c0_24] : memref<8x2xf32, #tpu.memory_space<vmem>>, vector<8x2xf32>
    tpu.vector_store %arg10[%c0_23, %c0_24], %32 {strides = array<i32>} : memref<8x2xf32, #tpu.memory_space<vmem>>, vector<8x2xf32>,
    return
  }
  func.func @transform_0(%arg0: i32) -> (i32, i32) {
    %c0_i32 = arith.constant 0 : i32
    %c0_i32_0 = arith.constant 0 : i32
    return %arg0, %c0_i32 : i32, i32
  }
  func.func @transform_1(%arg0: i32) -> (i32, i32) {
    %c0_i32 = arith.constant 0 : i32
    %c0_i32_0 = arith.constant 0 : i32
    %c0_i32_1 = arith.constant 0 : i32
    return %c0_i32, %c0_i32_0 : i32, i32
  }
  func.func @transform_2(%arg0: i32) -> (i32, i32) {
    %c0_i32 = arith.constant 0 : i32
    %c0_i32_0 = arith.constant 0 : i32
    %c0_i32_1 = arith.constant 0 : i32
    return %c0_i32, %c0_i32_0 : i32, i32
  }
  func.func @transform_3(%arg0: i32) -> (i32, i32) {
    %c0_i32 = arith.constant 0 : i32
    %c0_i32_0 = arith.constant 0 : i32
    %c0_i32_1 = arith.constant 0 : i32
    return %c0_i32, %c0_i32_0 : i32, i32
  }
  func.func @transform_4(%arg0: i32) -> (i32, i32) {
    %c0_i32 = arith.constant 0 : i32
    %c0_i32_0 = arith.constant 0 : i32
    %c0_i32_1 = arith.constant 0 : i32
    return %c0_i32, %c0_i32_0 : i32, i32
  }
  func.func @transform_5(%arg0: i32) -> (i32, i32) {
    %c0_i32 = arith.constant 0 : i32
    %c0_i32_0 = arith.constant 0 : i32
    %c0_i32_1 = arith.constant 0 : i32
    return %c0_i32, %c0_i32_0 : i32, i32
  }
  func.func @transform_6(%arg0: i32) -> (i32, i32) {
    %c0_i32 = arith.constant 0 : i32
    %c0_i32_0 = arith.constant 0 : i32
    %c0_i32_1 = arith.constant 0 : i32
    return %c0_i32, %c0_i32_0 : i32, i32
  }
  func.func @transform_7(%arg0: i32) -> (i32, i32) {
    %c0_i32 = arith.constant 0 : i32
    %c0_i32_0 = arith.constant 0 : i32
    %c0_i32_1 = arith.constant 0 : i32
    return %c0_i32, %c0_i32_0 : i32, i32
  }
  func.func @transform_8(%arg0: i32) -> (i32, i32) {
    %c0_i32 = arith.constant 0 : i32
    %c0_i32_0 = arith.constant 0 : i32
    %c0_i32_1 = arith.constant 0 : i32
    return %c0_i32, %c0_i32_0 : i32, i32
  }
  func.func @transform_9(%arg0: i32) -> (i32, i32) {
    %c0_i32 = arith.constant 0 : i32
    %c0_i32_0 = arith.constant 0 : i32
    return %arg0, %c0_i32 : i32, i32
  }
}

</mosaic_0001>

<llo_original>
// kernel: tpu_custom_call.1
$region0: #{tpu_custom_call.1}
  #allocation0 [shape = 'u32[]', space=smem, size = 0x4, offset = 0x4, fixed_abs, tag = 'smem constant byte address 0x4 - core index']
  #allocation1 [shape = 'u32[72,128]{1,0:T(1,128)}', space=vmem, size = 0x9000, scoped, tag = 'internal scratch']
  %s0 = inlined_call_operand.hbm [shape: bf16[8,24], index: 0, kind: input, shape index: {}]
  %s1 = inlined_call_operand.hbm [shape: bf16[24,512], index: 1, kind: input, shape index: {}]
  %s2 = inlined_call_operand.hbm [shape: f32[1,512], index: 2, kind: input, shape index: {}]
  %s3 = inlined_call_operand.hbm [shape: bf16[256,256], index: 3, kind: input, shape index: {}]
  %s4 = inlined_call_operand.vmem [shape: f32[1,256], index: 4, kind: input, shape index: {}]
  %s5 = inlined_call_operand.hbm [shape: bf16[256,256], index: 5, kind: input, shape index: {}]
  %s6 = inlined_call_operand.vmem [shape: f32[1,256], index: 6, kind: input, shape index: {}]
  %s7 = inlined_call_operand.hbm [shape: bf16[512,128], index: 7, kind: input, shape index: {}]
  %s8 = inlined_call_operand.vmem [shape: f32[1,2], index: 8, kind: input, shape index: {}]
  %s9 = inlined_call_operand.vmem [shape: f32[8,2], index: 9, kind: output, shape index: {}]
  %s10 = sld [smem:[#allocation0]]
  $region70: #{tpu_custom_call.1} parent=0
    _
  %s12 = ssub.s32 1, %s10
  %s13 = scalar_select 0, %s12, %s10
  $region1: #{tpu_custom_call.1} parent=0
    #allocation2 [shape = 'u8[2048]{0}', space=vmem, size = 0x800, scoped, tag = 'input window, operand 0, single buffered']
    #allocation3 [shape = 's32[1]{0}', space=sflag, size = 0x4, scoped, tag = 'scoped memory for tpu_custom_call.1']
    #allocation4 [shape = 'u8[24576]{0}', space=vmem, size = 0x6000, scoped, tag = 'input window, operand 1, single buffered']
    #allocation5 [shape = 's32[1]{0}', space=sflag, size = 0x4, scoped, tag = 'scoped memory for tpu_custom_call.1']
    #allocation6 [shape = 'u8[2048]{0}', space=vmem, size = 0x800, scoped, tag = 'input window, operand 2, single buffered']
    #allocation7 [shape = 'u8[131072]{0}', space=vmem, size = 0x20000, scoped, tag = 'input window, operand 3, single buffered']
    #allocation8 [shape = 's32[1]{0}', space=sflag, size = 0x4, scoped, tag = 'scoped memory for tpu_custom_call.1']
    #allocation9 [shape = 'u8[131072]{0}', space=vmem, size = 0x20000, scoped, tag = 'input window, operand 5, single buffered']
    #allocation10 [shape = 'u8[131072]{0}', space=vmem, size = 0x20000, scoped, tag = 'input window, operand 7, single buffered']
    #allocation11 [shape = 's32[1]{0}', space=sflag, size = 0x4, scoped, tag = 'scoped memory for tpu_custom_call.1']
    %14 = vsyncpa [#allocation3], 0
    %15 = vsyncpa [#allocation5], 0
    %16 = vsyncpa [#allocation8], 0
    %17 = vsyncpa [#allocation11], 0
    // Predicated region
    $region2: #{tpu_custom_call.1} parent=1 // pred_check
      _
    $region3: #{tpu_custom_call.1} parent=1 // pred_check_branch
      %19 = sbr.rel (0) target = $region5
    $region4: #{tpu_custom_call.1} parent=1 // pred_region
      %21 = vsyncadd [#allocation3], 0
      %s23 = sshll.u32 %s0, 4
      %s24 = int_to_ptr.hbm [resolvable:$true] %s23
      %s25 = sshll.u32 [#allocation2], 4
      %s26 = int_to_ptr.vmem [resolvable:$true] %s25
      %28 = dma.hbm_to_vmem [thread:$0]  %s24, 64, %s26, [#allocation3]
    $region5: #{tpu_custom_call.1} parent=1 // pred_fallthru
      _
    // Predicated region
    $region6: #{tpu_custom_call.1} parent=1 // pred_check
      _
    $region7: #{tpu_custom_call.1} parent=1 // pred_check_branch
      %30 = sbr.rel (0) target = $region9
    $region8: #{tpu_custom_call.1} parent=1 // pred_region
      %32 = vsyncadd [#allocation5], 0
      %s33 = sshll.u32 %s1, 4
      %s34 = int_to_ptr.hbm [resolvable:$true] %s33
      %s35 = sshll.u32 [#allocation4], 4
      %s36 = int_to_ptr.vmem [resolvable:$true] %s35
      %41 = dma.hbm_to_vmem [thread:$0]  %s34, 768, %s36, [#allocation5], 256, 256, 16
    $region9: #{tpu_custom_call.1} parent=1 // pred_fallthru
      _
    // Predicated region
    $region10: #{tpu_custom_call.1} parent=1 // pred_check
      _
    $region11: #{tpu_custom_call.1} parent=1 // pred_check_branch
      %43 = sbr.rel (0) target = $region13
    $region12: #{tpu_custom_call.1} parent=1 // pred_region
      %45 = vsyncadd [#allocation5], 0
      %s47 = sshll.u32 %s2, 4
      %s48 = int_to_ptr.hbm [resolvable:$true] %s47
      %s49 = sshll.u32 [#allocation6], 4
      %s50 = int_to_ptr.vmem [resolvable:$true] %s49
      %52 = dma.hbm_to_vmem [thread:$0]  %s48, 64, %s50, [#allocation5]
    $region13: #{tpu_custom_call.1} parent=1 // pred_fallthru
      _
    // Predicated region
    $region14: #{tpu_custom_call.1} parent=1 // pred_check
      _
    $region15: #{tpu_custom_call.1} parent=1 // pred_check_branch
      %54 = sbr.rel (0) target = $region17
    $region16: #{tpu_custom_call.1} parent=1 // pred_region
      %56 = vsyncadd [#allocation8], 0
      %s57 = sshll.u32 %s3, 4
      %s58 = int_to_ptr.hbm [resolvable:$true] %s57
      %s59 = sshll.u32 [#allocation7], 4
      %s60 = int_to_ptr.vmem [resolvable:$true] %s59
      %65 = dma.hbm_to_vmem [thread:$0]  %s58, 4096, %s60, [#allocation8], 128, 128, 8
    $region17: #{tpu_custom_call.1} parent=1 // pred_fallthru
      _
    // Predicated region
    $region18: #{tpu_custom_call.1} parent=1 // pred_check
      _
    $region19: #{tpu_custom_call.1} parent=1 // pred_check_branch
      %67 = sbr.rel (0) target = $region21
    $region20: #{tpu_custom_call.1} parent=1 // pred_region
      _
    $region21: #{tpu_custom_call.1} parent=1 // pred_fallthru
      _
    // Predicated region
    $region22: #{tpu_custom_call.1} parent=1 // pred_check
      _
    $region23: #{tpu_custom_call.1} parent=1 // pred_check_branch
      %69 = sbr.rel (0) target = $region25
    $region24: #{tpu_custom_call.1} parent=1 // pred_region
      %71 = vsyncadd [#allocation8], 0
      %s72 = sshll.u32 %s5, 4
      %s73 = int_to_ptr.hbm [resolvable:$true] %s72
      %s74 = sshll.u32 [#allocation9], 4
      %s75 = int_to_ptr.vmem [resolvable:$true] %s74
      %80 = dma.hbm_to_vmem [thread:$0]  %s73, 4096, %s75, [#allocation8], 128, 128, 8
    $region25: #{tpu_custom_call.1} parent=1 // pred_fallthru
      _
    // Predicated region
    $region26: #{tpu_custom_call.1} parent=1 // pred_check
      _
    $region27: #{tpu_custom_call.1} parent=1 // pred_check_branch
      %82 = sbr.rel (0) target = $region29
    $region28: #{tpu_custom_call.1} parent=1 // pred_region
      _
    $region29: #{tpu_custom_call.1} parent=1 // pred_fallthru
      _
    // Predicated region
    $region30: #{tpu_custom_call.1} parent=1 // pred_check
      _
    $region31: #{tpu_custom_call.1} parent=1 // pred_check_branch
      %84 = sbr.rel (0) target = $region33
    $region32: #{tpu_custom_call.1} parent=1 // pred_region
      %86 = vsyncadd [#allocation11], 0
      %s87 = sshll.u32 %s7, 4
      %s88 = int_to_ptr.hbm [resolvable:$true] %s87
      %s89 = sshll.u32 [#allocation10], 4
      %s90 = int_to_ptr.vmem [resolvable:$true] %s89
      %95 = dma.hbm_to_vmem [thread:$0]  %s88, 4096, %s90, [#allocation11], 64, 64, 4
    $region33: #{tpu_custom_call.1} parent=1 // pred_fallthru
      _
    // Predicated region
    $region34: #{tpu_custom_call.1} parent=1 // pred_check
      _
    $region35: #{tpu_custom_call.1} parent=1 // pred_check_branch
      %97 = sbr.rel (0) target = $region37
    $region36: #{tpu_custom_call.1} parent=1 // pred_region
      _
    $region37: #{tpu_custom_call.1} parent=1 // pred_fallthru
      _
    // Predicated region
    $region38: #{tpu_custom_call.1} parent=1 // pred_check
      _
    $region39: #{tpu_custom_call.1} parent=1 // pred_check_branch
      %99 = sbr.rel (0) target = $region41
    $region40: #{tpu_custom_call.1} parent=1 // pred_region
      %101 = dma.done [#allocation3], 64
    $region41: #{tpu_custom_call.1} parent=1 // pred_fallthru
      _
    // Predicated region
    $region42: #{tpu_custom_call.1} parent=1 // pred_check
      _
    $region43: #{tpu_custom_call.1} parent=1 // pred_check_branch
      %103 = sbr.rel (0) target = $region45
    $region44: #{tpu_custom_call.1} parent=1 // pred_region
      %105 = dma.done [#allocation5], 768
    $region45: #{tpu_custom_call.1} parent=1 // pred_fallthru
      _
    // Predicated region
    $region46: #{tpu_custom_call.1} parent=1 // pred_check
      _
    $region47: #{tpu_custom_call.1} parent=1 // pred_check_branch
      %107 = sbr.rel (0) target = $region49
    $region48: #{tpu_custom_call.1} parent=1 // pred_region
      %109 = dma.done [#allocation5], 64
    $region49: #{tpu_custom_call.1} parent=1 // pred_fallthru
      _
    // Predicated region
    $region50: #{tpu_custom_call.1} parent=1 // pred_check
      _
    $region51: #{tpu_custom_call.1} parent=1 // pred_check_branch
      %111 = sbr.rel (0) target = $region53
    $region52: #{tpu_custom_call.1} parent=1 // pred_region
      %113 = dma.done [#allocation8], 4096
    $region53: #{tpu_custom_call.1} parent=1 // pred_fallthru
      _
    // Predicated region
    $region54: #{tpu_custom_call.1} parent=1 // pred_check
      _
    $region55: #{tpu_custom_call.1} parent=1 // pred_check_branch
      %115 = sbr.rel (0) target = $region57
    $region56: #{tpu_custom_call.1} parent=1 // pred_region
      %117 = dma.done [#allocation8], 4096
    $region57: #{tpu_custom_call.1} parent=1 // pred_fallthru
      _
    // Predicated region
    $region58: #{tpu_custom_call.1} parent=1 // pred_check
      _
    $region59: #{tpu_custom_call.1} parent=1 // pred_check_branch
      %119 = sbr.rel (0) target = $region61
    $region60: #{tpu_custom_call.1} parent=1 // pred_region
      %121 = dma.done [#allocation11], 4096
    $region61: #{tpu_custom_call.1} parent=1 // pred_fallthru
      _
    %v123 = vld [vmem:[#allocation2] sm:$0xf]
    %v124 = vld [vmem:[#allocation4] sm:$0xff]
    %v125 = vld [vmem:[#allocation4 + $0x8] sm:$0xff]
    %v126 = vld [vmem:[#allocation4 + $0x10] sm:$0xff]
    %v127 = vld [vmem:[#allocation4 + $0x18] sm:$0xff]
    %v128 = vld [vmem:[#allocation4 + $0x20] sm:$0xff]
    %v129 = vld [vmem:[#allocation4 + $0x28] sm:$0xff]
    %v130 = vld [vmem:[#allocation6] sm:$0xf]
    %v132 = vperm.slane %v130, 0
    %v133 = vperm.slane %v130, 1
    %v134 = vperm.slane %v130, 2
    %v135 = vperm.slane %v130, 3
    %v146 = vunpack.c.l.b16 %v124
    %v147 = vunpack.c.h.b16 %v124
    %v148 = vunpack.c.l.b16 %v125
    %v149 = vunpack.c.h.b16 %v125
    %v150 = vunpack.c.l.b16 %v126
    %v151 = vunpack.c.h.b16 %v126
    %v152 = vunpack.c.l.b16 %v127
    %v153 = vunpack.c.h.b16 %v127
    %v154 = vunpack.c.l.b16 %v128
    %v155 = vunpack.c.h.b16 %v128
    %v156 = vunpack.c.l.b16 %v129
    %v157 = vunpack.c.h.b16 %v129
    %v158 = vpack.c.b16 %v150, %v146
    %v159 = vpack.c.b16 %v151, %v147
    %v160 = vpack.c.b16 %v152, %v148
    %v161 = vpack.c.b16 %v153, %v149
    %v162 = vpack.c.b16 %v154, %v154
    %v163 = vpack.c.b16 %v155, %v155
    %v164 = vpack.c.b16 %v156, %v156
    %v165 = vpack.c.b16 %v157, %v157
    %vm170 = vcmask 195584
    %v172 = vsel %vm170, %v123, 0
    %vm174 = vcmask 1043456
    %v176 = vsel %vm174, %v162, 0
    %v179 = vsel %vm174, %v163, 0
    %v182 = vsel %vm174, %v164, 0
    %v185 = vsel %vm174, %v165, 0
    %187 = vmatpush.bf16.msra.mxu0 0
    %188 = vmatpush.bf16.msra.mxu0 0
    %189 = vmatpush.bf16.msra.mxu0 0
    %190 = vmatpush.bf16.msra.mxu0 0
    %191 = vmatpush.bf16.msra.mxu0 0
    %192 = vmatpush.bf16.msra.mxu0 0
    %193 = vmatpush.bf16.msra.mxu0 %v176
    %194 = vmatpush.bf16.msra.mxu0 %v158
    %195 = vmatmul.bf16.gmra.mxu0 %v172
    %v196 = vpop.f32.mrf.mxu0
    %v197 = vadd.f32 %v132, %v196
    %v198 = vpop.f32.mrf.mxu0
    %199 = vdwg.mxu0
    %200 = vmatpush.bf16.msra.mxu0 0
    %201 = vmatpush.bf16.msra.mxu0 0
    %202 = vmatpush.bf16.msra.mxu0 0
    %203 = vmatpush.bf16.msra.mxu0 0
    %204 = vmatpush.bf16.msra.mxu0 0
    %205 = vmatpush.bf16.msra.mxu0 0
    %206 = vmatpush.bf16.msra.mxu0 %v179
    %207 = vmatpush.bf16.msra.mxu0 %v159
    %208 = vmatmul.bf16.gmra.mxu0 %v172
    %v209 = vpop.f32.mrf.mxu0
    %v210 = vadd.f32 %v133, %v209
    %v211 = vpop.f32.mrf.mxu0
    %212 = vdwg.mxu0
    %213 = vmatpush.bf16.msra.mxu0 0
    %214 = vmatpush.bf16.msra.mxu0 0
    %215 = vmatpush.bf16.msra.mxu0 0
    %216 = vmatpush.bf16.msra.mxu0 0
    %217 = vmatpush.bf16.msra.mxu0 0
    %218 = vmatpush.bf16.msra.mxu0 0
    %219 = vmatpush.bf16.msra.mxu0 %v182
    %220 = vmatpush.bf16.msra.mxu0 %v160
    %221 = vmatmul.bf16.gmra.mxu0 %v172
    %v222 = vpop.f32.mrf.mxu0
    %v223 = vadd.f32 %v134, %v222
    %v224 = vpop.f32.mrf.mxu0
    %225 = vdwg.mxu0
    %226 = vmatpush.bf16.msra.mxu0 0
    %227 = vmatpush.bf16.msra.mxu0 0
    %228 = vmatpush.bf16.msra.mxu0 0
    %229 = vmatpush.bf16.msra.mxu0 0
    %230 = vmatpush.bf16.msra.mxu0 0
    %231 = vmatpush.bf16.msra.mxu0 0
    %232 = vmatpush.bf16.msra.mxu0 %v185
    %233 = vmatpush.bf16.msra.mxu0 %v161
    %234 = vmatmul.bf16.gmra.mxu0 %v172
    %v235 = vpop.f32.mrf.mxu0
    %v236 = vadd.f32 %v135, %v235
    %v237 = vpop.f32.mrf.mxu0
    %238 = vdwg.mxu0
    %v239 = vmax.f32 %v197, 0.0
    %v240 = vmax.f32 %v210, 0.0
    %v241 = vmax.f32 %v223, 0.0
    %v242 = vmax.f32 %v236, 0.0
    %v243 = vpack.c.bf16 %v240, %v239
    %v244 = vpack.c.bf16 %v242, %v241
    %v245 = vld [vmem:[#allocation7] sm:$0xff]
    %v246 = vld [vmem:[#allocation7 + $0x8] sm:$0xff]
    %v247 = vld [vmem:[#allocation7 + $0x10] sm:$0xff]
    %v248 = vld [vmem:[#allocation7 + $0x18] sm:$0xff]
    %v249 = vld [vmem:[#allocation7 + $0x20] sm:$0xff]
    %v250 = vld [vmem:[#allocation7 + $0x28] sm:$0xff]
    %v251 = vld [vmem:[#allocation7 + $0x30] sm:$0xff]
    %v252 = vld [vmem:[#allocation7 + $0x38] sm:$0xff]
    %v253 = vld [vmem:[#allocation7 + $0x40] sm:$0xff]
    %v254 = vld [vmem:[#allocation7 + $0x48] sm:$0xff]
    %v255 = vld [vmem:[#allocation7 + $0x50] sm:$0xff]
    %v256 = vld [vmem:[#allocation7 + $0x58] sm:$0xff]
    %v257 = vld [vmem:[#allocation7 + $0x60] sm:$0xff]
    %v258 = vld [vmem:[#allocation7 + $0x68] sm:$0xff]
    %v259 = vld [vmem:[#allocation7 + $0x70] sm:$0xff]
    %v260 = vld [vmem:[#allocation7 + $0x78] sm:$0xff]
    %v261 = vld [vmem:[#allocation7 + $0x80] sm:$0xff]
    %v262 = vld [vmem:[#allocation7 + $0x88] sm:$0xff]
    %v263 = vld [vmem:[#allocation7 + $0x90] sm:$0xff]
    %v264 = vld [vmem:[#allocation7 + $0x98] sm:$0xff]
    %v265 = vld [vmem:[#allocation7 + $0xa0] sm:$0xff]
    %v266 = vld [vmem:[#allocation7 + $0xa8] sm:$0xff]
    %v267 = vld [vmem:[#allocation7 + $0xb0] sm:$0xff]
    %v268 = vld [vmem:[#allocation7 + $0xb8] sm:$0xff]
    %v269 = vld [vmem:[#allocation7 + $0xc0] sm:$0xff]
    %v270 = vld [vmem:[#allocation7 + $0xc8] sm:$0xff]
    %v271 = vld [vmem:[#allocation7 + $0xd0] sm:$0xff]
    %v272 = vld [vmem:[#allocation7 + $0xd8] sm:$0xff]
    %v273 = vld [vmem:[#allocation7 + $0xe0] sm:$0xff]
    %v274 = vld [vmem:[#allocation7 + $0xe8] sm:$0xff]
    %v275 = vld [vmem:[#allocation7 + $0xf0] sm:$0xff]
    %v276 = vld [vmem:[#allocation7 + $0xf8] sm:$0xff]
    %v277 = vld [vmem:[%s4] sm:$0x3]
    %v279 = vperm.slane %v277, 0
    %v280 = vperm.slane %v277, 1
    %v284 = vunpack.c.l.b16 %v243
    %v285 = vunpack.c.h.b16 %v243
    %v286 = vpack.c.b16 %v284, %v284
    %v287 = vpack.c.b16 %v285, %v285
    %v322 = vunpack.c.l.b16 %v245
    %v323 = vunpack.c.h.b16 %v245
    %v324 = vunpack.c.l.b16 %v246
    %v325 = vunpack.c.h.b16 %v246
    %v326 = vunpack.c.l.b16 %v247
    %v327 = vunpack.c.h.b16 %v247
    %v328 = vunpack.c.l.b16 %v248
    %v329 = vunpack.c.h.b16 %v248
    %v330 = vunpack.c.l.b16 %v249
    %v331 = vunpack.c.h.b16 %v249
    %v332 = vunpack.c.l.b16 %v250
    %v333 = vunpack.c.h.b16 %v250
    %v334 = vunpack.c.l.b16 %v251
    %v335 = vunpack.c.h.b16 %v251
    %v336 = vunpack.c.l.b16 %v252
    %v337 = vunpack.c.h.b16 %v252
    %v338 = vunpack.c.l.b16 %v253
    %v339 = vunpack.c.h.b16 %v253
    %v340 = vunpack.c.l.b16 %v254
    %v341 = vunpack.c.h.b16 %v254
    %v342 = vunpack.c.l.b16 %v255
    %v343 = vunpack.c.h.b16 %v255
    %v344 = vunpack.c.l.b16 %v256
    %v345 = vunpack.c.h.b16 %v256
    %v346 = vunpack.c.l.b16 %v257
    %v347 = vunpack.c.h.b16 %v257
    %v348 = vunpack.c.l.b16 %v258
    %v349 = vunpack.c.h.b16 %v258
    %v350 = vunpack.c.l.b16 %v259
    %v351 = vunpack.c.h.b16 %v259
    %v352 = vunpack.c.l.b16 %v260
    %v353 = vunpack.c.h.b16 %v260
    %v354 = vunpack.c.l.b16 %v261
    %v355 = vunpack.c.h.b16 %v261
    %v356 = vunpack.c.l.b16 %v262
    %v357 = vunpack.c.h.b16 %v262
    %v358 = vunpack.c.l.b16 %v263
    %v359 = vunpack.c.h.b16 %v263
    %v360 = vunpack.c.l.b16 %v264
    %v361 = vunpack.c.h.b16 %v264
    %v362 = vunpack.c.l.b16 %v265
    %v363 = vunpack.c.h.b16 %v265
    %v364 = vunpack.c.l.b16 %v266
    %v365 = vunpack.c.h.b16 %v266
    %v366 = vunpack.c.l.b16 %v267
    %v367 = vunpack.c.h.b16 %v267
    %v368 = vunpack.c.l.b16 %v268
    %v369 = vunpack.c.h.b16 %v268
    %v370 = vunpack.c.l.b16 %v269
    %v371 = vunpack.c.h.b16 %v269
    %v372 = vunpack.c.l.b16 %v270
    %v373 = vunpack.c.h.b16 %v270
    %v374 = vunpack.c.l.b16 %v271
    %v375 = vunpack.c.h.b16 %v271
    %v376 = vunpack.c.l.b16 %v272
    %v377 = vunpack.c.h.b16 %v272
    %v378 = vunpack.c.l.b16 %v273
    %v379 = vunpack.c.h.b16 %v273
    %v380 = vunpack.c.l.b16 %v274
    %v381 = vunpack.c.h.b16 %v274
    %v382 = vunpack.c.l.b16 %v275
    %v383 = vunpack.c.h.b16 %v275
    %v384 = vunpack.c.l.b16 %v276
    %v385 = vunpack.c.h.b16 %v276
    %v386 = vpack.c.b16 %v324, %v322
    %v387 = vpack.c.b16 %v325, %v323
    %v388 = vpack.c.b16 %v328, %v326
    %v389 = vpack.c.b16 %v329, %v327
    %v390 = vpack.c.b16 %v332, %v330
    %v391 = vpack.c.b16 %v333, %v331
    %v392 = vpack.c.b16 %v336, %v334
    %v393 = vpack.c.b16 %v337, %v335
    %v394 = vpack.c.b16 %v340, %v338
    %v395 = vpack.c.b16 %v341, %v339
    %v396 = vpack.c.b16 %v344, %v342
    %v397 = vpack.c.b16 %v345, %v343
    %v398 = vpack.c.b16 %v348, %v346
    %v399 = vpack.c.b16 %v349, %v347
    %v400 = vpack.c.b16 %v352, %v350
    %v401 = vpack.c.b16 %v353, %v351
    %v402 = vpack.c.b16 %v356, %v354
    %v403 = vpack.c.b16 %v357, %v355
    %v404 = vpack.c.b16 %v360, %v358
    %v405 = vpack.c.b16 %v361, %v359
    %v406 = vpack.c.b16 %v364, %v362
    %v407 = vpack.c.b16 %v365, %v363
    %v408 = vpack.c.b16 %v368, %v366
    %v409 = vpack.c.b16 %v369, %v367
    %v410 = vpack.c.b16 %v372, %v370
    %v411 = vpack.c.b16 %v373, %v371
    %v412 = vpack.c.b16 %v376, %v374
    %v413 = vpack.c.b16 %v377, %v375
    %v414 = vpack.c.b16 %v380, %v378
    %v415 = vpack.c.b16 %v381, %v379
    %v416 = vpack.c.b16 %v384, %v382
    %v417 = vpack.c.b16 %v385, %v383
    %450 = vmatpush.bf16.msra.mxu0 %v400
    %451 = vmatpush.bf16.msra.mxu0 %v398
    %452 = vmatpush.bf16.msra.mxu0 %v396
    %453 = vmatpush.bf16.msra.mxu0 %v394
    %454 = vmatpush.bf16.msra.mxu0 %v392
    %455 = vmatpush.bf16.msra.mxu0 %v390
    %456 = vmatpush.bf16.msra.mxu0 %v388
    %457 = vmatpush.bf16.msra.mxu0 %v386
    %458 = vmatmul.bf16.gmra.mxu0 %v286
    %v459 = vpop.f32.mrf.mxu0
    %v460 = vadd.f32 %v279, %v459
    %v461 = vpop.f32.mrf.mxu0
    %462 = vdwg.mxu0
    %463 = vmatpush.bf16.msra.mxu0 %v416
    %464 = vmatpush.bf16.msra.mxu0 %v414
    %465 = vmatpush.bf16.msra.mxu0 %v412
    %466 = vmatpush.bf16.msra.mxu0 %v410
    %467 = vmatpush.bf16.msra.mxu0 %v408
    %468 = vmatpush.bf16.msra.mxu0 %v406
    %469 = vmatpush.bf16.msra.mxu0 %v404
    %470 = vmatpush.bf16.msra.mxu0 %v402
    %471 = vmatmul.bf16.gmra.mxu0 %v287
    %v472 = vpop.f32.mrf.mxu0
    %v473 = vadd.f32 %v460, %v472
    %v474 = vpop.f32.mrf.mxu0
    %475 = vdwg.mxu0
    %476 = vmatpush.bf16.msra.mxu0 %v401
    %477 = vmatpush.bf16.msra.mxu0 %v399
    %478 = vmatpush.bf16.msra.mxu0 %v397
    %479 = vmatpush.bf16.msra.mxu0 %v395
    %480 = vmatpush.bf16.msra.mxu0 %v393
    %481 = vmatpush.bf16.msra.mxu0 %v391
    %482 = vmatpush.bf16.msra.mxu0 %v389
    %483 = vmatpush.bf16.msra.mxu0 %v387
    %484 = vmatmul.bf16.gmra.mxu0 %v286
    %v485 = vpop.f32.mrf.mxu0
    %v486 = vadd.f32 %v280, %v485
    %v487 = vpop.f32.mrf.mxu0
    %488 = vdwg.mxu0
    %489 = vmatpush.bf16.msra.mxu0 %v417
    %490 = vmatpush.bf16.msra.mxu0 %v415
    %491 = vmatpush.bf16.msra.mxu0 %v413
    %492 = vmatpush.bf16.msra.mxu0 %v411
    %493 = vmatpush.bf16.msra.mxu0 %v409
    %494 = vmatpush.bf16.msra.mxu0 %v407
    %495 = vmatpush.bf16.msra.mxu0 %v405
    %496 = vmatpush.bf16.msra.mxu0 %v403
    %497 = vmatmul.bf16.gmra.mxu0 %v287
    %v498 = vpop.f32.mrf.mxu0
    %v499 = vadd.f32 %v486, %v498
    %v500 = vpop.f32.mrf.mxu0
    %501 = vdwg.mxu0
    %v502 = vmax.f32 %v473, 0.0
    %v503 = vmax.f32 %v499, 0.0
    %v504 = vld [vmem:[#allocation9] sm:$0xff]
    %v505 = vld [vmem:[#allocation9 + $0x8] sm:$0xff]
    %v506 = vld [vmem:[#allocation9 + $0x10] sm:$0xff]
    %v507 = vld [vmem:[#allocation9 + $0x18] sm:$0xff]
    %v508 = vld [vmem:[#allocation9 + $0x20] sm:$0xff]
    %v509 = vld [vmem:[#allocation9 + $0x28] sm:$0xff]
    %v510 = vld [vmem:[#allocation9 + $0x30] sm:$0xff]
    %v511 = vld [vmem:[#allocation9 + $0x38] sm:$0xff]
    %v512 = vld [vmem:[#allocation9 + $0x40] sm:$0xff]
    %v513 = vld [vmem:[#allocation9 + $0x48] sm:$0xff]
    %v514 = vld [vmem:[#allocation9 + $0x50] sm:$0xff]
    %v515 = vld [vmem:[#allocation9 + $0x58] sm:$0xff]
    %v516 = vld [vmem:[#allocation9 + $0x60] sm:$0xff]
    %v517 = vld [vmem:[#allocation9 + $0x68] sm:$0xff]
    %v518 = vld [vmem:[#allocation9 + $0x70] sm:$0xff]
    %v519 = vld [vmem:[#allocation9 + $0x78] sm:$0xff]
    %v520 = vld [vmem:[#allocation9 + $0x80] sm:$0xff]
    %v521 = vld [vmem:[#allocation9 + $0x88] sm:$0xff]
    %v522 = vld [vmem:[#allocation9 + $0x90] sm:$0xff]
    %v523 = vld [vmem:[#allocation9 + $0x98] sm:$0xff]
    %v524 = vld [vmem:[#allocation9 + $0xa0] sm:$0xff]
    %v525 = vld [vmem:[#allocation9 + $0xa8] sm:$0xff]
    %v526 = vld [vmem:[#allocation9 + $0xb0] sm:$0xff]
    %v527 = vld [vmem:[#allocation9 + $0xb8] sm:$0xff]
    %v528 = vld [vmem:[#allocation9 + $0xc0] sm:$0xff]
    %v529 = vld [vmem:[#allocation9 + $0xc8] sm:$0xff]
    %v530 = vld [vmem:[#allocation9 + $0xd0] sm:$0xff]
    %v531 = vld [vmem:[#allocation9 + $0xd8] sm:$0xff]
    %v532 = vld [vmem:[#allocation9 + $0xe0] sm:$0xff]
    %v533 = vld [vmem:[#allocation9 + $0xe8] sm:$0xff]
    %v534 = vld [vmem:[#allocation9 + $0xf0] sm:$0xff]
    %v535 = vld [vmem:[#allocation9 + $0xf8] sm:$0xff]
    %v536 = vld [vmem:[%s6] sm:$0x3]
    %v538 = vperm.slane %v536, 0
    %v539 = vperm.slane %v536, 1
    %v543 = vunpack.c.l.b16 %v244
    %v544 = vunpack.c.h.b16 %v244
    %v545 = vpack.c.b16 %v543, %v543
    %v546 = vpack.c.b16 %v544, %v544
    %v581 = vunpack.c.l.b16 %v504
    %v582 = vunpack.c.h.b16 %v504
    %v583 = vunpack.c.l.b16 %v505
    %v584 = vunpack.c.h.b16 %v505
    %v585 = vunpack.c.l.b16 %v506
    %v586 = vunpack.c.h.b16 %v506
    %v587 = vunpack.c.l.b16 %v507
    %v588 = vunpack.c.h.b16 %v507
    %v589 = vunpack.c.l.b16 %v508
    %v590 = vunpack.c.h.b16 %v508
    %v591 = vunpack.c.l.b16 %v509
    %v592 = vunpack.c.h.b16 %v509
    %v593 = vunpack.c.l.b16 %v510
    %v594 = vunpack.c.h.b16 %v510
    %v595 = vunpack.c.l.b16 %v511
    %v596 = vunpack.c.h.b16 %v511
    %v597 = vunpack.c.l.b16 %v512
    %v598 = vunpack.c.h.b16 %v512
    %v599 = vunpack.c.l.b16 %v513
    %v600 = vunpack.c.h.b16 %v513
    %v601 = vunpack.c.l.b16 %v514
    %v602 = vunpack.c.h.b16 %v514
    %v603 = vunpack.c.l.b16 %v515
    %v604 = vunpack.c.h.b16 %v515
    %v605 = vunpack.c.l.b16 %v516
    %v606 = vunpack.c.h.b16 %v516
    %v607 = vunpack.c.l.b16 %v517
    %v608 = vunpack.c.h.b16 %v517
    %v609 = vunpack.c.l.b16 %v518
    %v610 = vunpack.c.h.b16 %v518
    %v611 = vunpack.c.l.b16 %v519
    %v612 = vunpack.c.h.b16 %v519
    %v613 = vunpack.c.l.b16 %v520
    %v614 = vunpack.c.h.b16 %v520
    %v615 = vunpack.c.l.b16 %v521
    %v616 = vunpack.c.h.b16 %v521
    %v617 = vunpack.c.l.b16 %v522
    %v618 = vunpack.c.h.b16 %v522
    %v619 = vunpack.c.l.b16 %v523
    %v620 = vunpack.c.h.b16 %v523
    %v621 = vunpack.c.l.b16 %v524
    %v622 = vunpack.c.h.b16 %v524
    %v623 = vunpack.c.l.b16 %v525
    %v624 = vunpack.c.h.b16 %v525
    %v625 = vunpack.c.l.b16 %v526
    %v626 = vunpack.c.h.b16 %v526
    %v627 = vunpack.c.l.b16 %v527
    %v628 = vunpack.c.h.b16 %v527
    %v629 = vunpack.c.l.b16 %v528
    %v630 = vunpack.c.h.b16 %v528
    %v631 = vunpack.c.l.b16 %v529
    %v632 = vunpack.c.h.b16 %v529
    %v633 = vunpack.c.l.b16 %v530
    %v634 = vunpack.c.h.b16 %v530
    %v635 = vunpack.c.l.b16 %v531
    %v636 = vunpack.c.h.b16 %v531
    %v637 = vunpack.c.l.b16 %v532
    %v638 = vunpack.c.h.b16 %v532
    %v639 = vunpack.c.l.b16 %v533
    %v640 = vunpack.c.h.b16 %v533
    %v641 = vunpack.c.l.b16 %v534
    %v642 = vunpack.c.h.b16 %v534
    %v643 = vunpack.c.l.b16 %v535
    %v644 = vunpack.c.h.b16 %v535
    %v645 = vpack.c.b16 %v583, %v581
    %v646 = vpack.c.b16 %v584, %v582
    %v647 = vpack.c.b16 %v587, %v585
    %v648 = vpack.c.b16 %v588, %v586
    %v649 = vpack.c.b16 %v591, %v589
    %v650 = vpack.c.b16 %v592, %v590
    %v651 = vpack.c.b16 %v595, %v593
    %v652 = vpack.c.b16 %v596, %v594
    %v653 = vpack.c.b16 %v599, %v597
    %v654 = vpack.c.b16 %v600, %v598
    %v655 = vpack.c.b16 %v603, %v601
    %v656 = vpack.c.b16 %v604, %v602
    %v657 = vpack.c.b16 %v607, %v605
    %v658 = vpack.c.b16 %v608, %v606
    %v659 = vpack.c.b16 %v611, %v609
    %v660 = vpack.c.b16 %v612, %v610
    %v661 = vpack.c.b16 %v615, %v613
    %v662 = vpack.c.b16 %v616, %v614
    %v663 = vpack.c.b16 %v619, %v617
    %v664 = vpack.c.b16 %v620, %v618
    %v665 = vpack.c.b16 %v623, %v621
    %v666 = vpack.c.b16 %v624, %v622
    %v667 = vpack.c.b16 %v627, %v625
    %v668 = vpack.c.b16 %v628, %v626
    %v669 = vpack.c.b16 %v631, %v629
    %v670 = vpack.c.b16 %v632, %v630
    %v671 = vpack.c.b16 %v635, %v633
    %v672 = vpack.c.b16 %v636, %v634
    %v673 = vpack.c.b16 %v639, %v637
    %v674 = vpack.c.b16 %v640, %v638
    %v675 = vpack.c.b16 %v643, %v641
    %v676 = vpack.c.b16 %v644, %v642
    %709 = vmatpush.bf16.msra.mxu0 %v659
    %710 = vmatpush.bf16.msra.mxu0 %v657
    %711 = vmatpush.bf16.msra.mxu0 %v655
    %712 = vmatpush.bf16.msra.mxu0 %v653
    %713 = vmatpush.bf16.msra.mxu0 %v651
    %714 = vmatpush.bf16.msra.mxu0 %v649
    %715 = vmatpush.bf16.msra.mxu0 %v647
    %716 = vmatpush.bf16.msra.mxu0 %v645
    %717 = vmatmul.bf16.gmra.mxu0 %v545
    %v718 = vpop.f32.mrf.mxu0
    %v719 = vadd.f32 %v538, %v718
    %v720 = vpop.f32.mrf.mxu0
    %721 = vdwg.mxu0
    %722 = vmatpush.bf16.msra.mxu0 %v675
    %723 = vmatpush.bf16.msra.mxu0 %v673
    %724 = vmatpush.bf16.msra.mxu0 %v671
    %725 = vmatpush.bf16.msra.mxu0 %v669
    %726 = vmatpush.bf16.msra.mxu0 %v667
    %727 = vmatpush.bf16.msra.mxu0 %v665
    %728 = vmatpush.bf16.msra.mxu0 %v663
    %729 = vmatpush.bf16.msra.mxu0 %v661
    %730 = vmatmul.bf16.gmra.mxu0 %v546
    %v731 = vpop.f32.mrf.mxu0
    %v732 = vadd.f32 %v719, %v731
    %v733 = vpop.f32.mrf.mxu0
    %734 = vdwg.mxu0
    %735 = vmatpush.bf16.msra.mxu0 %v660
    %736 = vmatpush.bf16.msra.mxu0 %v658
    %737 = vmatpush.bf16.msra.mxu0 %v656
    %738 = vmatpush.bf16.msra.mxu0 %v654
    %739 = vmatpush.bf16.msra.mxu0 %v652
    %740 = vmatpush.bf16.msra.mxu0 %v650
    %741 = vmatpush.bf16.msra.mxu0 %v648
    %742 = vmatpush.bf16.msra.mxu0 %v646
    %743 = vmatmul.bf16.gmra.mxu0 %v545
    %v744 = vpop.f32.mrf.mxu0
    %v745 = vadd.f32 %v539, %v744
    %v746 = vpop.f32.mrf.mxu0
    %747 = vdwg.mxu0
    %748 = vmatpush.bf16.msra.mxu0 %v676
    %749 = vmatpush.bf16.msra.mxu0 %v674
    %750 = vmatpush.bf16.msra.mxu0 %v672
    %751 = vmatpush.bf16.msra.mxu0 %v670
    %752 = vmatpush.bf16.msra.mxu0 %v668
    %753 = vmatpush.bf16.msra.mxu0 %v666
    %754 = vmatpush.bf16.msra.mxu0 %v664
    %755 = vmatpush.bf16.msra.mxu0 %v662
    %756 = vmatmul.bf16.gmra.mxu0 %v546
    %v757 = vpop.f32.mrf.mxu0
    %v758 = vadd.f32 %v745, %v757
    %v759 = vpop.f32.mrf.mxu0
    %760 = vdwg.mxu0
    %v761 = vmax.f32 %v732, 0.0
    %v762 = vmax.f32 %v758, 0.0
    %v763 = vpack.c.bf16 %v502, %v502
    %v764 = vpack.c.bf16 %v503, %v503
    %v765 = vpack.c.bf16 %v761, %v761
    %v766 = vpack.c.bf16 %v762, %v762
    %v767 = vld [vmem:[#allocation10] sm:$0xf]
    %v768 = vld [vmem:[#allocation10 + $0x4] sm:$0xf]
    %v769 = vld [vmem:[#allocation10 + $0x8] sm:$0xf]
    %v770 = vld [vmem:[#allocation10 + $0xc] sm:$0xf]
    %v771 = vld [vmem:[#allocation10 + $0x10] sm:$0xf]
    %v772 = vld [vmem:[#allocation10 + $0x14] sm:$0xf]
    %v773 = vld [vmem:[#allocation10 + $0x18] sm:$0xf]
    %v774 = vld [vmem:[#allocation10 + $0x1c] sm:$0xf]
    %v775 = vld [vmem:[#allocation10 + $0x20] sm:$0xf]
    %v776 = vld [vmem:[#allocation10 + $0x24] sm:$0xf]
    %v777 = vld [vmem:[#allocation10 + $0x28] sm:$0xf]
    %v778 = vld [vmem:[#allocation10 + $0x2c] sm:$0xf]
    %v779 = vld [vmem:[#allocation10 + $0x30] sm:$0xf]
    %v780 = vld [vmem:[#allocation10 + $0x34] sm:$0xf]
    %v781 = vld [vmem:[#allocation10 + $0x38] sm:$0xf]
    %v782 = vld [vmem:[#allocation10 + $0x3c] sm:$0xf]
    %v783 = vld [vmem:[#allocation10 + $0x40] sm:$0xf]
    %v784 = vld [vmem:[#allocation10 + $0x44] sm:$0xf]
    %v785 = vld [vmem:[#allocation10 + $0x48] sm:$0xf]
    %v786 = vld [vmem:[#allocation10 + $0x4c] sm:$0xf]
    %v787 = vld [vmem:[#allocation10 + $0x50] sm:$0xf]
    %v788 = vld [vmem:[#allocation10 + $0x54] sm:$0xf]
    %v789 = vld [vmem:[#allocation10 + $0x58] sm:$0xf]
    %v790 = vld [vmem:[#allocation10 + $0x5c] sm:$0xf]
    %v791 = vld [vmem:[#allocation10 + $0x60] sm:$0xf]
    %v792 = vld [vmem:[#allocation10 + $0x64] sm:$0xf]
    %v793 = vld [vmem:[#allocation10 + $0x68] sm:$0xf]
    %v794 = vld [vmem:[#allocation10 + $0x6c] sm:$0xf]
    %v795 = vld [vmem:[#allocation10 + $0x70] sm:$0xf]
    %v796 = vld [vmem:[#allocation10 + $0x74] sm:$0xf]
    %v797 = vld [vmem:[#allocation10 + $0x78] sm:$0xf]
    %v798 = vld [vmem:[#allocation10 + $0x7c] sm:$0xf]
    %v799 = vld [vmem:[#allocation10 + $0x80] sm:$0xf]
    %v800 = vld [vmem:[#allocation10 + $0x84] sm:$0xf]
    %v801 = vld [vmem:[#allocation10 + $0x88] sm:$0xf]
    %v802 = vld [vmem:[#allocation10 + $0x8c] sm:$0xf]
    %v803 = vld [vmem:[#allocation10 + $0x90] sm:$0xf]
    %v804 = vld [vmem:[#allocation10 + $0x94] sm:$0xf]
    %v805 = vld [vmem:[#allocation10 + $0x98] sm:$0xf]
    %v806 = vld [vmem:[#allocation10 + $0x9c] sm:$0xf]
    %v807 = vld [vmem:[#allocation10 + $0xa0] sm:$0xf]
    %v808 = vld [vmem:[#allocation10 + $0xa4] sm:$0xf]
    %v809 = vld [vmem:[#allocation10 + $0xa8] sm:$0xf]
    %v810 = vld [vmem:[#allocation10 + $0xac] sm:$0xf]
    %v811 = vld [vmem:[#allocation10 + $0xb0] sm:$0xf]
    %v812 = vld [vmem:[#allocation10 + $0xb4] sm:$0xf]
    %v813 = vld [vmem:[#allocation10 + $0xb8] sm:$0xf]
    %v814 = vld [vmem:[#allocation10 + $0xbc] sm:$0xf]
    %v815 = vld [vmem:[#allocation10 + $0xc0] sm:$0xf]
    %v816 = vld [vmem:[#allocation10 + $0xc4] sm:$0xf]
    %v817 = vld [vmem:[#allocation10 + $0xc8] sm:$0xf]
    %v818 = vld [vmem:[#allocation10 + $0xcc] sm:$0xf]
    %v819 = vld [vmem:[#allocation10 + $0xd0] sm:$0xf]
    %v820 = vld [vmem:[#allocation10 + $0xd4] sm:$0xf]
    %v821 = vld [vmem:[#allocation10 + $0xd8] sm:$0xf]
    %v822 = vld [vmem:[#allocation10 + $0xdc] sm:$0xf]
    %v823 = vld [vmem:[#allocation10 + $0xe0] sm:$0xf]
    %v824 = vld [vmem:[#allocation10 + $0xe4] sm:$0xf]
    %v825 = vld [vmem:[#allocation10 + $0xe8] sm:$0xf]
    %v826 = vld [vmem:[#allocation10 + $0xec] sm:$0xf]
    %v827 = vld [vmem:[#allocation10 + $0xf0] sm:$0xf]
    %v828 = vld [vmem:[#allocation10 + $0xf4] sm:$0xf]
    %v829 = vld [vmem:[#allocation10 + $0xf8] sm:$0xf]
    %v830 = vld [vmem:[#allocation10 + $0xfc] sm:$0xf]
    %v895 = vunpack.c.l.b16 %v767
    %v896 = vunpack.c.l.b16 %v768
    %v897 = vunpack.c.l.b16 %v769
    %v898 = vunpack.c.l.b16 %v770
    %v899 = vunpack.c.l.b16 %v771
    %v900 = vunpack.c.l.b16 %v772
    %v901 = vunpack.c.l.b16 %v773
    %v902 = vunpack.c.l.b16 %v774
    %v903 = vunpack.c.l.b16 %v775
    %v904 = vunpack.c.l.b16 %v776
    %v905 = vunpack.c.l.b16 %v777
    %v906 = vunpack.c.l.b16 %v778
    %v907 = vunpack.c.l.b16 %v779
    %v908 = vunpack.c.l.b16 %v780
    %v909 = vunpack.c.l.b16 %v781
    %v910 = vunpack.c.l.b16 %v782
    %v911 = vunpack.c.l.b16 %v783
    %v912 = vunpack.c.l.b16 %v784
    %v913 = vunpack.c.l.b16 %v785
    %v914 = vunpack.c.l.b16 %v786
    %v915 = vunpack.c.l.b16 %v787
    %v916 = vunpack.c.l.b16 %v788
    %v917 = vunpack.c.l.b16 %v789
    %v918 = vunpack.c.l.b16 %v790
    %v919 = vunpack.c.l.b16 %v791
    %v920 = vunpack.c.l.b16 %v792
    %v921 = vunpack.c.l.b16 %v793
    %v922 = vunpack.c.l.b16 %v794
    %v923 = vunpack.c.l.b16 %v795
    %v924 = vunpack.c.l.b16 %v796
    %v925 = vunpack.c.l.b16 %v797
    %v926 = vunpack.c.l.b16 %v798
    %v927 = vunpack.c.l.b16 %v799
    %v928 = vunpack.c.l.b16 %v800
    %v929 = vunpack.c.l.b16 %v801
    %v930 = vunpack.c.l.b16 %v802
    %v931 = vunpack.c.l.b16 %v803
    %v932 = vunpack.c.l.b16 %v804
    %v933 = vunpack.c.l.b16 %v805
    %v934 = vunpack.c.l.b16 %v806
    %v935 = vunpack.c.l.b16 %v807
    %v936 = vunpack.c.l.b16 %v808
    %v937 = vunpack.c.l.b16 %v809
    %v938 = vunpack.c.l.b16 %v810
    %v939 = vunpack.c.l.b16 %v811
    %v940 = vunpack.c.l.b16 %v812
    %v941 = vunpack.c.l.b16 %v813
    %v942 = vunpack.c.l.b16 %v814
    %v943 = vunpack.c.l.b16 %v815
    %v944 = vunpack.c.l.b16 %v816
    %v945 = vunpack.c.l.b16 %v817
    %v946 = vunpack.c.l.b16 %v818
    %v947 = vunpack.c.l.b16 %v819
    %v948 = vunpack.c.l.b16 %v820
    %v949 = vunpack.c.l.b16 %v821
    %v950 = vunpack.c.l.b16 %v822
    %v951 = vunpack.c.l.b16 %v823
    %v952 = vunpack.c.l.b16 %v824
    %v953 = vunpack.c.l.b16 %v825
    %v954 = vunpack.c.l.b16 %v826
    %v955 = vunpack.c.l.b16 %v827
    %v956 = vunpack.c.l.b16 %v828
    %v957 = vunpack.c.l.b16 %v829
    %v958 = vunpack.c.l.b16 %v830
    %v959 = vpack.c.b16 %v896, %v895
    %v960 = vpack.c.b16 %v898, %v897
    %v961 = vpack.c.b16 %v900, %v899
    %v962 = vpack.c.b16 %v902, %v901
    %v963 = vpack.c.b16 %v904, %v903
    %v964 = vpack.c.b16 %v906, %v905
    %v965 = vpack.c.b16 %v908, %v907
    %v966 = vpack.c.b16 %v910, %v909
    %v967 = vpack.c.b16 %v912, %v911
    %v968 = vpack.c.b16 %v914, %v913
    %v969 = vpack.c.b16 %v916, %v915
    %v970 = vpack.c.b16 %v918, %v917
    %v971 = vpack.c.b16 %v920, %v919
    %v972 = vpack.c.b16 %v922, %v921
    %v973 = vpack.c.b16 %v924, %v923
    %v974 = vpack.c.b16 %v926, %v925
    %v975 = vpack.c.b16 %v928, %v927
    %v976 = vpack.c.b16 %v930, %v929
    %v977 = vpack.c.b16 %v932, %v931
    %v978 = vpack.c.b16 %v934, %v933
    %v979 = vpack.c.b16 %v936, %v935
    %v980 = vpack.c.b16 %v938, %v937
    %v981 = vpack.c.b16 %v940, %v939
    %v982 = vpack.c.b16 %v942, %v941
    %v983 = vpack.c.b16 %v944, %v943
    %v984 = vpack.c.b16 %v946, %v945
    %v985 = vpack.c.b16 %v948, %v947
    %v986 = vpack.c.b16 %v950, %v949
    %v987 = vpack.c.b16 %v952, %v951
    %v988 = vpack.c.b16 %v954, %v953
    %v989 = vpack.c.b16 %v956, %v955
    %v990 = vpack.c.b16 %v958, %v957
    %1023 = vmatpush.bf16.msra.mxu0 %v966
    %1024 = vmatpush.bf16.msra.mxu0 %v965
    %1025 = vmatpush.bf16.msra.mxu0 %v964
    %1026 = vmatpush.bf16.msra.mxu0 %v963
    %1027 = vmatpush.bf16.msra.mxu0 %v962
    %1028 = vmatpush.bf16.msra.mxu0 %v961
    %1029 = vmatpush.bf16.msra.mxu0 %v960
    %1030 = vmatpush.bf16.msra.mxu0 %v959
    %1031 = vmatmul.bf16.gmra.mxu0 %v763
    %v1032 = vpop.f32.mrf.mxu0
    %v1033 = vadd.f32 0.0, %v1032
    %v1034 = vpop.f32.mrf.mxu0
    %1035 = vdwg.mxu0
    %1036 = vmatpush.bf16.msra.mxu0 %v974
    %1037 = vmatpush.bf16.msra.mxu0 %v973
    %1038 = vmatpush.bf16.msra.mxu0 %v972
    %1039 = vmatpush.bf16.msra.mxu0 %v971
    %1040 = vmatpush.bf16.msra.mxu0 %v970
    %1041 = vmatpush.bf16.msra.mxu0 %v969
    %1042 = vmatpush.bf16.msra.mxu0 %v968
    %1043 = vmatpush.bf16.msra.mxu0 %v967
    %1044 = vmatmul.bf16.gmra.mxu0 %v764
    %v1045 = vpop.f32.mrf.mxu0
    %v1046 = vadd.f32 %v1033, %v1045
    %v1047 = vpop.f32.mrf.mxu0
    %1048 = vdwg.mxu0
    %1049 = vmatpush.bf16.msra.mxu0 %v982
    %1050 = vmatpush.bf16.msra.mxu0 %v981
    %1051 = vmatpush.bf16.msra.mxu0 %v980
    %1052 = vmatpush.bf16.msra.mxu0 %v979
    %1053 = vmatpush.bf16.msra.mxu0 %v978
    %1054 = vmatpush.bf16.msra.mxu0 %v977
    %1055 = vmatpush.bf16.msra.mxu0 %v976
    %1056 = vmatpush.bf16.msra.mxu0 %v975
    %1057 = vmatmul.bf16.gmra.mxu0 %v765
    %v1058 = vpop.f32.mrf.mxu0
    %v1059 = vadd.f32 %v1046, %v1058
    %v1060 = vpop.f32.mrf.mxu0
    %1061 = vdwg.mxu0
    %1062 = vmatpush.bf16.msra.mxu0 %v990
    %1063 = vmatpush.bf16.msra.mxu0 %v989
    %1064 = vmatpush.bf16.msra.mxu0 %v988
    %1065 = vmatpush.bf16.msra.mxu0 %v987
    %1066 = vmatpush.bf16.msra.mxu0 %v986
    %1067 = vmatpush.bf16.msra.mxu0 %v985
    %1068 = vmatpush.bf16.msra.mxu0 %v984
    %1069 = vmatpush.bf16.msra.mxu0 %v983
    %1070 = vmatmul.bf16.gmra.mxu0 %v766
    %v1071 = vpop.f32.mrf.mxu0
    %v1072 = vadd.f32 %v1059, %v1071
    %v1073 = vpop.f32.mrf.mxu0
    %1074 = vdwg.mxu0
    %v1075 = vld [vmem:[%s8] sm:$0x1]
    %v1077 = vperm.slane %v1075, 0
    %v1079 = vadd.f32 %v1072, %v1077
    %vm1080 = vcmask 15360
    %1081 = vst.msk [vmem:[%s9] sm:$0xff] %vm1080, %v1079
    // Predicated region
    $region62: #{tpu_custom_call.1} parent=1 // pred_check
      _
    $region63: #{tpu_custom_call.1} parent=1 // pred_check_branch
      %1083 = sbr.rel (0) target = $region65
    $region64: #{tpu_custom_call.1} parent=1 // pred_region
      _
    $region65: #{tpu_custom_call.1} parent=1 // pred_fallthru
      _
    // Predicated region
    $region66: #{tpu_custom_call.1} parent=1 // pred_check
      _
    $region67: #{tpu_custom_call.1} parent=1 // pred_check_branch
      %1085 = sbr.rel (0) target = $region69
    $region68: #{tpu_custom_call.1} parent=1 // pred_region
      _
    $region69: #{tpu_custom_call.1} parent=1 // pred_fallthru
      _
    %1086 = vsyncpa [#allocation3], 1
    %1087 = vsyncpa [#allocation5], 1
    %1088 = vsyncpa [#allocation8], 1
    %1089 = vsyncpa [#allocation11], 1

</llo_original>
